<compile_context>
chip_gen: v7x
topology: tpu7x:2x2x1
jax: 0.10.0
libtpu: 0.0.40
codegen_flags: <defaults>
</compile_context>

<pallas_src>
import functools

import jax
import jax.numpy as jnp
from jax import lax
from jax.experimental import pallas as pl
from jax.experimental.pallas import tpu as pltpu
import numpy as np

EPS = 1e-8            # torch.nn.CosineSimilarity eps
LANE = 128
DEFAULT_TILE_SUBLANES = 512   # 512*128 = 65536 faces per grid step


def _round_up(x, m):
    return ((x + m - 1) // m) * m


def _face_normal_loss_kernel(ref_ref, cur_ref, out_ref, *, n_true, mask_needed):
    # ref_ref / cur_ref: (9, S, 128) f32, row = component*3 + vertex, lanes = faces.
    # out_ref          : (1, 1, 128) f32 per-tile, per-lane partial sums of (1 - cos).
    S = ref_ref.shape[1]
    CH = 8 if S % 8 == 0 else S          # S is a multiple of 8, or a single small tile
    num_chunks = S // CH
    tile_base = pl.program_id(0) * (S * LANE)

    def body(j, acc):
        start = pl.multiple_of(j * CH, CH)

        def comp(ref, c, k):             # component c of vertex k -> (CH, 128)
            return ref[3 * c + k, pl.ds(start, CH), :]

        def face_normal(ref):
            e1 = [comp(ref, c, 1) - comp(ref, c, 0) for c in range(3)]
            e2 = [comp(ref, c, 2) - comp(ref, c, 1) for c in range(3)]
            return (e1[1] * e2[2] - e1[2] * e2[1],
                    e1[2] * e2[0] - e1[0] * e2[2],
                    e1[0] * e2[1] - e1[1] * e2[0])

        rx, ry, rz = face_normal(ref_ref)
        cx, cy, cz = face_normal(cur_ref)

        dot = rx * cx + ry * cy + rz * cz
        r2 = rx * rx + ry * ry + rz * rz
        c2 = cx * cx + cy * cy + cz * cz
        # scale-invariant cosine: one EUP rsqrt replaces normalize + divide
        cos = dot * lax.rsqrt(jnp.maximum(r2 * c2, EPS * EPS))
        contrib = 1.0 - cos

        if mask_needed:
            srow = lax.broadcasted_iota(jnp.int32, (CH, LANE), 0)
            lane = lax.broadcasted_iota(jnp.int32, (CH, LANE), 1)
            gidx = tile_base + (start + srow) * LANE + lane
            contrib = jnp.where(gidx < n_true, contrib, 0.0)

        return acc + contrib

    acc = lax.fori_loop(0, num_chunks, body, jnp.zeros((CH, LANE), jnp.float32))
    out_ref[0] = jnp.sum(acc, axis=0, keepdims=True)   # (1, 128) lane-dense store


def face_normal_loss(ref_mesh_V, mesh_V, mesh_F, *, tile_sublanes=DEFAULT_TILE_SUBLANES):
    """Pallas implementation of FaceNormalLoss.forward (sampling lines are dead code)."""
    B, N, _ = ref_mesh_V.shape
    _, F, _ = mesh_F.shape
    n = B * F

    # --- choose tiling (lane-padded, >=2 tiles when possible for megacore) -------
    S_total = -(-n // LANE)                       # faces rounded up to lane groups
    if S_total <= 8:
        S_tile = S_total                          # single small tile (block == array)
    elif S_total <= 2 * tile_sublanes:
        S_tile = _round_up((S_total + 1) // 2, 8) # 2 tiles, sublane-aligned
    else:
        S_tile = tile_sublanes
    S_pad = _round_up(S_total, S_tile)
    n_pad = S_pad * LANE
    pad = n_pad - n
    num_tiles = S_pad // S_tile

    # --- build component-major (9, S_pad, 128) triangle tables ------------------
    # Pad the tiny int32 face table (12 B/face) instead of the big float arrays;
    # padded faces index vertex 0 and are masked inside the kernel.
    offs = (jnp.arange(B, dtype=jnp.int32) * N).reshape(B, 1, 1)
    flat_F = (mesh_F.astype(jnp.int32) + offs).reshape(n, 3)
    if pad:
        flat_F = jnp.pad(flat_F, ((0, pad), (0, 0)))
    flat_F_T = flat_F.T                                       # (3, n_pad) small

    # TODO(synk): the vertex gather by mesh_F indices is a data-dependent gather
    # with no clean BlockSpec form; it is done here in XLA glue so the gather
    # fusion itself emits the component-major (9, S_pad, 128) layout directly.
    def gather_rows(V):
        flat_V = V.astype(jnp.float32).reshape(B * N, 3).T    # (3, B*N), tiny
        tri = flat_V[:, flat_F_T]                             # (3 comp, 3 vert, n_pad)
        return tri.reshape(9, S_pad, LANE)

    ref_rows = gather_rows(ref_mesh_V)
    cur_rows = gather_rows(mesh_V)

    kernel = functools.partial(_face_normal_loss_kernel, n_true=n, mask_needed=pad > 0)

    partials = pl.pallas_call(
        kernel,
        out_shape=jax.ShapeDtypeStruct((num_tiles, 1, LANE), jnp.float32),
        grid_spec=pltpu.PrefetchScalarGridSpec(
            num_scalar_prefetch=0,
            grid=(num_tiles,),
            in_specs=[
                pl.BlockSpec((9, S_tile, LANE), lambda i: (0, i, 0)),
                pl.BlockSpec((9, S_tile, LANE), lambda i: (0, i, 0)),
            ],
            out_specs=pl.BlockSpec((1, 1, LANE), lambda i: (i, 0, 0)),
        ),
        compiler_params=pltpu.CompilerParams(dimension_semantics=("parallel",)),
    )(ref_rows, cur_rows)

    # Final tiny reduction; divide by the TRUE face count (padded lanes were masked).
    return jnp.sum(partials) / n


def _reference(ref_mesh_V, mesh_V, mesh_F, eps=EPS):
    """Pure-JAX transcription of the torch forward."""
    def unit_normals(V):
        tri = jax.vmap(lambda v, f: v[f])(V, mesh_F)          # (B, F, 3, 3)
        e1 = tri[..., 1, :] - tri[..., 0, :]
        e2 = tri[..., 2, :] - tri[..., 1, :]
        nrm = jnp.cross(e1, e2)
        area = jnp.linalg.norm(nrm, axis=-1, keepdims=True)
        return nrm / area
    nr = unit_normals(ref_mesh_V)
    nc = unit_normals(mesh_V)
    dot = jnp.sum(nr * nc, axis=-1)
    denom = jnp.maximum(jnp.linalg.norm(nr, axis=-1) * jnp.linalg.norm(nc, axis=-1), eps)
    return jnp.mean(1.0 - dot / denom)


def _make_inputs(key, B, N, F):
    k1, k2, k3 = jax.random.split(key, 3)
    ref_mesh_V = jax.random.normal(k1, (B, N, 3), dtype=jnp.float32)
    mesh_V = ref_mesh_V + 0.1 * jax.random.normal(k2, (B, N, 3), dtype=jnp.float32)
    # Distinct vertex indices per face (avoid exactly-degenerate faces where the
    # torch reference itself produces NaN normals).
    base = jax.random.randint(k3, (B, F, 1), 0, N, dtype=jnp.int32)
    mesh_F = (base + jnp.arange(3, dtype=jnp.int32)[None, None, :]) % N
    return ref_mesh_V, mesh_V, mesh_F


if __name__ == "__main__":
    key = jax.random.PRNGKey(0)

    # (B, N, F): small case (single tile + masking), 2-tile case, multi-chunk case.
    cases = [(2, 16, 24), (2, 32, 1000), (2, 64, 10000)]
    for i, (B, N, F) in enumerate(cases):
        rV, cV, mF = _make_inputs(jax.random.fold_in(key, i), B, N, F)
        out = jax.block_until_ready(face_normal_loss(rV, cV, mF))
        ref = jax.block_until_ready(_reference(rV, cV, mF))
        np.testing.assert_allclose(np.asarray(out), np.asarray(ref),
                                   rtol=1e-4, atol=1e-5)

    print("KERNEL_OK")
</pallas_src>

<mosaic_0001>
module attributes {stable_mosaic.version = 11 : i64} {
  func.func @_face_normal_loss_kernel(%arg0: i32, %arg1: memref<9x1x128xf32, #tpu.memory_space<vmem>>, %arg2: memref<9x1x128xf32, #tpu.memory_space<vmem>>, %arg3: memref<1x1x128xf32, #tpu.memory_space<vmem>>) attributes {dimension_semantics = [#tpu.dimension_semantics<parallel>], iteration_bounds = array<i64: 1>, scalar_prefetch = 0 : i64, scratch_operands = 0 : i64, tpu.core_type = #tpu.core_type<tc>, window_params = [{transform_indices = @transform_0, window_bounds = array<i64: 9, 1, 128>}, {transform_indices = @transform_1, window_bounds = array<i64: 9, 1, 128>}, {transform_indices = @transform_2, window_bounds = array<i64: 1, 1, 128>}]} {
    %c128_i32 = arith.constant 128 : i32
    %0 = arith.muli %arg0, %c128_i32 : i32
    %cst = arith.constant 0.000000e+00 : f32
    %1 = vector.broadcast %cst : f32 to vector<1x128xf32>
    %c0_i32 = arith.constant 0 : i32
    %c1_i32 = arith.constant 1 : i32
    %2 = arith.muli %c0_i32, %c1_i32 : i32
    %3 = tpu.assume_multiple %2, 1 : i32
    %c1 = arith.constant 1 : index
    %4 = arith.index_cast %3 : i32 to index
    %c0 = arith.constant 0 : index
    %5 = vector.load %arg1[%c1, %4, %c0] : memref<9x1x128xf32, #tpu.memory_space<vmem>>, vector<1x1x128xf32>
    %6 = vector.shape_cast %5 : vector<1x1x128xf32> to vector<1x128xf32>
    %c0_0 = arith.constant 0 : index
    %7 = arith.index_cast %3 : i32 to index
    %c0_1 = arith.constant 0 : index
    %8 = vector.load %arg1[%c0_0, %7, %c0_1] : memref<9x1x128xf32, #tpu.memory_space<vmem>>, vector<1x1x128xf32>
    %9 = vector.shape_cast %8 : vector<1x1x128xf32> to vector<1x128xf32>
    %10 = arith.subf %6, %9 : vector<1x128xf32>
    %c4 = arith.constant 4 : index
    %11 = arith.index_cast %3 : i32 to index
    %c0_2 = arith.constant 0 : index
    %12 = vector.load %arg1[%c4, %11, %c0_2] : memref<9x1x128xf32, #tpu.memory_space<vmem>>, vector<1x1x128xf32>
    %13 = vector.shape_cast %12 : vector<1x1x128xf32> to vector<1x128xf32>
    %c3 = arith.constant 3 : index
    %14 = arith.index_cast %3 : i32 to index
    %c0_3 = arith.constant 0 : index
    %15 = vector.load %arg1[%c3, %14, %c0_3] : memref<9x1x128xf32, #tpu.memory_space<vmem>>, vector<1x1x128xf32>
    %16 = vector.shape_cast %15 : vector<1x1x128xf32> to vector<1x128xf32>
    %17 = arith.subf %13, %16 : vector<1x128xf32>
    %c7 = arith.constant 7 : index
    %18 = arith.index_cast %3 : i32 to index
    %c0_4 = arith.constant 0 : index
    %19 = vector.load %arg1[%c7, %18, %c0_4] : memref<9x1x128xf32, #tpu.memory_space<vmem>>, vector<1x1x128xf32>
    %20 = vector.shape_cast %19 : vector<1x1x128xf32> to vector<1x128xf32>
    %c6 = arith.constant 6 : index
    %21 = arith.index_cast %3 : i32 to index
    %c0_5 = arith.constant 0 : index
    %22 = vector.load %arg1[%c6, %21, %c0_5] : memref<9x1x128xf32, #tpu.memory_space<vmem>>, vector<1x1x128xf32>
    %23 = vector.shape_cast %22 : vector<1x1x128xf32> to vector<1x128xf32>
    %24 = arith.subf %20, %23 : vector<1x128xf32>
    %c2 = arith.constant 2 : index
    %25 = arith.index_cast %3 : i32 to index
    %c0_6 = arith.constant 0 : index
    %26 = vector.load %arg1[%c2, %25, %c0_6] : memref<9x1x128xf32, #tpu.memory_space<vmem>>, vector<1x1x128xf32>
    %27 = vector.shape_cast %26 : vector<1x1x128xf32> to vector<1x128xf32>
    %c1_7 = arith.constant 1 : index
    %28 = arith.index_cast %3 : i32 to index
    %c0_8 = arith.constant 0 : index
    %29 = vector.load %arg1[%c1_7, %28, %c0_8] : memref<9x1x128xf32, #tpu.memory_space<vmem>>, vector<1x1x128xf32>
    %30 = vector.shape_cast %29 : vector<1x1x128xf32> to vector<1x128xf32>
    %31 = arith.subf %27, %30 : vector<1x128xf32>
    %c5 = arith.constant 5 : index
    %32 = arith.index_cast %3 : i32 to index
    %c0_9 = arith.constant 0 : index
    %33 = vector.load %arg1[%c5, %32, %c0_9] : memref<9x1x128xf32, #tpu.memory_space<vmem>>, vector<1x1x128xf32>
    %34 = vector.shape_cast %33 : vector<1x1x128xf32> to vector<1x128xf32>
    %c4_10 = arith.constant 4 : index
    %35 = arith.index_cast %3 : i32 to index
    %c0_11 = arith.constant 0 : index
    %36 = vector.load %arg1[%c4_10, %35, %c0_11] : memref<9x1x128xf32, #tpu.memory_space<vmem>>, vector<1x1x128xf32>
    %37 = vector.shape_cast %36 : vector<1x1x128xf32> to vector<1x128xf32>
    %38 = arith.subf %34, %37 : vector<1x128xf32>
    %c8 = arith.constant 8 : index
    %39 = arith.index_cast %3 : i32 to index
    %c0_12 = arith.constant 0 : index
    %40 = vector.load %arg1[%c8, %39, %c0_12] : memref<9x1x128xf32, #tpu.memory_space<vmem>>, vector<1x1x128xf32>
    %41 = vector.shape_cast %40 : vector<1x1x128xf32> to vector<1x128xf32>
    %c7_13 = arith.constant 7 : index
    %42 = arith.index_cast %3 : i32 to index
    %c0_14 = arith.constant 0 : index
    %43 = vector.load %arg1[%c7_13, %42, %c0_14] : memref<9x1x128xf32, #tpu.memory_space<vmem>>, vector<1x1x128xf32>
    %44 = vector.shape_cast %43 : vector<1x1x128xf32> to vector<1x128xf32>
    %45 = arith.subf %41, %44 : vector<1x128xf32>
    %46 = arith.mulf %17, %45 : vector<1x128xf32>
    %47 = arith.mulf %24, %38 : vector<1x128xf32>
    %48 = arith.subf %46, %47 : vector<1x128xf32>
    %49 = arith.mulf %24, %31 : vector<1x128xf32>
    %50 = arith.mulf %10, %45 : vector<1x128xf32>
    %51 = arith.subf %49, %50 : vector<1x128xf32>
    %52 = arith.mulf %10, %38 : vector<1x128xf32>
    %53 = arith.mulf %17, %31 : vector<1x128xf32>
    %54 = arith.subf %52, %53 : vector<1x128xf32>
    %c1_15 = arith.constant 1 : index
    %55 = arith.index_cast %3 : i32 to index
    %c0_16 = arith.constant 0 : index
    %56 = vector.load %arg2[%c1_15, %55, %c0_16] : memref<9x1x128xf32, #tpu.memory_space<vmem>>, vector<1x1x128xf32>
    %57 = vector.shape_cast %56 : vector<1x1x128xf32> to vector<1x128xf32>
    %c0_17 = arith.constant 0 : index
    %58 = arith.index_cast %3 : i32 to index
    %c0_18 = arith.constant 0 : index
    %59 = vector.load %arg2[%c0_17, %58, %c0_18] : memref<9x1x128xf32, #tpu.memory_space<vmem>>, vector<1x1x128xf32>
    %60 = vector.shape_cast %59 : vector<1x1x128xf32> to vector<1x128xf32>
    %61 = arith.subf %57, %60 : vector<1x128xf32>
    %c4_19 = arith.constant 4 : index
    %62 = arith.index_cast %3 : i32 to index
    %c0_20 = arith.constant 0 : index
    %63 = vector.load %arg2[%c4_19, %62, %c0_20] : memref<9x1x128xf32, #tpu.memory_space<vmem>>, vector<1x1x128xf32>
    %64 = vector.shape_cast %63 : vector<1x1x128xf32> to vector<1x128xf32>
    %c3_21 = arith.constant 3 : index
    %65 = arith.index_cast %3 : i32 to index
    %c0_22 = arith.constant 0 : index
    %66 = vector.load %arg2[%c3_21, %65, %c0_22] : memref<9x1x128xf32, #tpu.memory_space<vmem>>, vector<1x1x128xf32>
    %67 = vector.shape_cast %66 : vector<1x1x128xf32> to vector<1x128xf32>
    %68 = arith.subf %64, %67 : vector<1x128xf32>
    %c7_23 = arith.constant 7 : index
    %69 = arith.index_cast %3 : i32 to index
    %c0_24 = arith.constant 0 : index
    %70 = vector.load %arg2[%c7_23, %69, %c0_24] : memref<9x1x128xf32, #tpu.memory_space<vmem>>, vector<1x1x128xf32>
    %71 = vector.shape_cast %70 : vector<1x1x128xf32> to vector<1x128xf32>
    %c6_25 = arith.constant 6 : index
    %72 = arith.index_cast %3 : i32 to index
    %c0_26 = arith.constant 0 : index
    %73 = vector.load %arg2[%c6_25, %72, %c0_26] : memref<9x1x128xf32, #tpu.memory_space<vmem>>, vector<1x1x128xf32>
    %74 = vector.shape_cast %73 : vector<1x1x128xf32> to vector<1x128xf32>
    %75 = arith.subf %71, %74 : vector<1x128xf32>
    %c2_27 = arith.constant 2 : index
    %76 = arith.index_cast %3 : i32 to index
    %c0_28 = arith.constant 0 : index
    %77 = vector.load %arg2[%c2_27, %76, %c0_28] : memref<9x1x128xf32, #tpu.memory_space<vmem>>, vector<1x1x128xf32>
    %78 = vector.shape_cast %77 : vector<1x1x128xf32> to vector<1x128xf32>
    %c1_29 = arith.constant 1 : index
    %79 = arith.index_cast %3 : i32 to index
    %c0_30 = arith.constant 0 : index
    %80 = vector.load %arg2[%c1_29, %79, %c0_30] : memref<9x1x128xf32, #tpu.memory_space<vmem>>, vector<1x1x128xf32>
    %81 = vector.shape_cast %80 : vector<1x1x128xf32> to vector<1x128xf32>
    %82 = arith.subf %78, %81 : vector<1x128xf32>
    %c5_31 = arith.constant 5 : index
    %83 = arith.index_cast %3 : i32 to index
    %c0_32 = arith.constant 0 : index
    %84 = vector.load %arg2[%c5_31, %83, %c0_32] : memref<9x1x128xf32, #tpu.memory_space<vmem>>, vector<1x1x128xf32>
    %85 = vector.shape_cast %84 : vector<1x1x128xf32> to vector<1x128xf32>
    %c4_33 = arith.constant 4 : index
    %86 = arith.index_cast %3 : i32 to index
    %c0_34 = arith.constant 0 : index
    %87 = vector.load %arg2[%c4_33, %86, %c0_34] : memref<9x1x128xf32, #tpu.memory_space<vmem>>, vector<1x1x128xf32>
    %88 = vector.shape_cast %87 : vector<1x1x128xf32> to vector<1x128xf32>
    %89 = arith.subf %85, %88 : vector<1x128xf32>
    %c8_35 = arith.constant 8 : index
    %90 = arith.index_cast %3 : i32 to index
    %c0_36 = arith.constant 0 : index
    %91 = vector.load %arg2[%c8_35, %90, %c0_36] : memref<9x1x128xf32, #tpu.memory_space<vmem>>, vector<1x1x128xf32>
    %92 = vector.shape_cast %91 : vector<1x1x128xf32> to vector<1x128xf32>
    %c7_37 = arith.constant 7 : index
    %93 = arith.index_cast %3 : i32 to index
    %c0_38 = arith.constant 0 : index
    %94 = vector.load %arg2[%c7_37, %93, %c0_38] : memref<9x1x128xf32, #tpu.memory_space<vmem>>, vector<1x1x128xf32>
    %95 = vector.shape_cast %94 : vector<1x1x128xf32> to vector<1x128xf32>
    %96 = arith.subf %92, %95 : vector<1x128xf32>
    %97 = arith.mulf %68, %96 : vector<1x128xf32>
    %98 = arith.mulf %75, %89 : vector<1x128xf32>
    %99 = arith.subf %97, %98 : vector<1x128xf32>
    %100 = arith.mulf %75, %82 : vector<1x128xf32>
    %101 = arith.mulf %61, %96 : vector<1x128xf32>
    %102 = arith.subf %100, %101 : vector<1x128xf32>
    %103 = arith.mulf %61, %89 : vector<1x128xf32>
    %104 = arith.mulf %68, %82 : vector<1x128xf32>
    %105 = arith.subf %103, %104 : vector<1x128xf32>
    %106 = arith.mulf %48, %99 : vector<1x128xf32>
    %107 = arith.mulf %51, %102 : vector<1x128xf32>
    %108 = arith.addf %106, %107 : vector<1x128xf32>
    %109 = arith.mulf %54, %105 : vector<1x128xf32>
    %110 = arith.addf %108, %109 : vector<1x128xf32>
    %111 = arith.mulf %48, %48 : vector<1x128xf32>
    %112 = arith.mulf %51, %51 : vector<1x128xf32>
    %113 = arith.addf %111, %112 : vector<1x128xf32>
    %114 = arith.mulf %54, %54 : vector<1x128xf32>
    %115 = arith.addf %113, %114 : vector<1x128xf32>
    %116 = arith.mulf %99, %99 : vector<1x128xf32>
    %117 = arith.mulf %102, %102 : vector<1x128xf32>
    %118 = arith.addf %116, %117 : vector<1x128xf32>
    %119 = arith.mulf %105, %105 : vector<1x128xf32>
    %120 = arith.addf %118, %119 : vector<1x128xf32>
    %121 = arith.mulf %115, %120 : vector<1x128xf32>
    %cst_39 = arith.constant 1.000000e-16 : f32
    %122 = vector.broadcast %cst_39 : f32 to vector<1x128xf32>
    %123 = arith.maximumf %121, %122 : vector<1x128xf32>
    %124 = math.rsqrt %123 : vector<1x128xf32>
    %125 = arith.mulf %110, %124 : vector<1x128xf32>
    %cst_40 = arith.constant 1.000000e+00 : f32
    %126 = vector.broadcast %cst_40 : f32 to vector<1x128xf32>
    %127 = arith.subf %126, %125 : vector<1x128xf32>
    %128 = tpu.iota {dimensions = array<i32: 0>} : vector<1x128xi32>
    %129 = tpu.iota {dimensions = array<i32: 1>} : vector<1x128xi32>
    %130 = vector.broadcast %3 : i32 to vector<1x128xi32>
    %131 = arith.addi %130, %128 : vector<1x128xi32>
    %c128_i32_41 = arith.constant 128 : i32
    %132 = vector.broadcast %c128_i32_41 : i32 to vector<1x128xi32>
    %133 = arith.muli %131, %132 : vector<1x128xi32>
    %134 = vector.broadcast %0 : i32 to vector<1x128xi32>
    %135 = arith.addi %134, %133 : vector<1x128xi32>
    %136 = arith.addi %135, %129 : vector<1x128xi32>
    %c48_i32 = arith.constant 48 : i32
    %137 = vector.broadcast %c48_i32 : i32 to vector<1x128xi32>
    %138 = arith.cmpi slt, %136, %137 : vector<1x128xi32>
    %cst_42 = arith.constant 0.000000e+00 : f32
    %139 = vector.broadcast %cst_42 : f32 to vector<1x128xf32>
    %140 = arith.select %138, %127, %139 : vector<1x128xi1>, vector<1x128xf32>
    %141 = arith.addf %1, %140 : vector<1x128xf32>
    %c1_i32_43 = arith.constant 1 : i32
    %cst_44 = arith.constant dense<0.000000e+00> : vector<128xf32>
    %142 = vector.multi_reduction <add>, %141, %cst_44 [0] : vector<1x128xf32> to vector<128xf32>
    %143 = vector.shape_cast %142 : vector<128xf32> to vector<1x128xf32>
    %c0_45 = arith.constant 0 : index
    %c0_46 = arith.constant 0 : index
    %c0_47 = arith.constant 0 : index
    %144 = vector.load %arg3[%c0_45, %c0_46, %c0_47] : memref<1x1x128xf32, #tpu.memory_space<vmem>>, vector<1x1x128xf32>
    %145 = vector.shape_cast %144 : vector<1x1x128xf32> to vector<1x128xf32>
    %146 = vector.shape_cast %143 : vector<1x128xf32> to vector<1x1x128xf32>
    tpu.vector_store %arg3[%c0_45, %c0_46, %c0_47], %146 {strides = array<i32>} : memref<1x1x128xf32, #tpu.memory_space<vmem>>, vector<1x1x128xf32>,
    return
  }
  func.func @transform_0(%arg0: i32) -> (i32, i32, i32) {
    %c0_i32 = arith.constant 0 : i32
    %c0_i32_0 = arith.constant 0 : i32
    %c0_i32_1 = arith.constant 0 : i32
    return %c0_i32, %arg0, %c0_i32_0 : i32, i32, i32
  }
  func.func @transform_1(%arg0: i32) -> (i32, i32, i32) {
    %c0_i32 = arith.constant 0 : i32
    %c0_i32_0 = arith.constant 0 : i32
    %c0_i32_1 = arith.constant 0 : i32
    return %c0_i32, %arg0, %c0_i32_0 : i32, i32, i32
  }
  func.func @transform_2(%arg0: i32) -> (i32, i32, i32) {
    %c0_i32 = arith.constant 0 : i32
    %c0_i32_0 = arith.constant 0 : i32
    %c0_i32_1 = arith.constant 0 : i32
    return %arg0, %c0_i32, %c0_i32_0 : i32, i32, i32
  }
}

</mosaic_0001>

<llo_original>
// kernel: tpu_custom_call.1
$region0: #{tpu_custom_call.1}
  #allocation0 [shape = 'u32[]', space=smem, size = 0x4, offset = 0x4, fixed_abs, tag = 'smem constant byte address 0x4 - core index']
  #allocation1 [shape = 'u32[144,128]{1,0:T(1,128)}', space=vmem, size = 0x12000, scoped, tag = 'internal scratch']
  %s0 = inlined_call_operand.hbm [shape: f32[9,1,128], index: 0, kind: input, shape index: {}]
  %s1 = inlined_call_operand.hbm [shape: f32[9,1,128], index: 1, kind: input, shape index: {}]
  %s2 = inlined_call_operand.hbm [shape: f32[1,1,128], index: 2, kind: output, shape index: {}]
  %s3 = sld [smem:[#allocation0]]
  $region26: #{tpu_custom_call.1} parent=0
    _
  %s5 = ssub.s32 1, %s3
  %s6 = scalar_select 0, %s5, %s3
  $region1: #{tpu_custom_call.1} parent=0
    #allocation2 [shape = 'u8[4608]{0}', space=vmem, size = 0x1400, scoped, tag = 'input window, operand 0, single buffered']
    #allocation3 [shape = 's32[1]{0}', space=sflag, size = 0x4, scoped, tag = 'scoped memory for tpu_custom_call.1']
    #allocation4 [shape = 's32[1]{0}', space=sflag, size = 0x4, scoped, tag = 'scoped memory for tpu_custom_call.1']
    #allocation5 [shape = 'u8[4608]{0}', space=vmem, size = 0x1400, scoped, tag = 'input window, operand 1, single buffered']
    #allocation6 [shape = 's32[1]{0}', space=sflag, size = 0x4, scoped, tag = 'scoped memory for tpu_custom_call.1']
    #allocation7 [shape = 'u8[512]{0}', space=vmem, size = 0x400, scoped, tag = 'output window, operand 0, single buffered']
    %7 = vsyncpa [#allocation3], 0
    %8 = vsyncpa [#allocation6], 0
    %9 = vsyncpa [#allocation4], 0
    // Predicated region
    $region2: #{tpu_custom_call.1} parent=1 // pred_check
      _
    $region3: #{tpu_custom_call.1} parent=1 // pred_check_branch
      %11 = sbr.rel (0) target = $region5
    $region4: #{tpu_custom_call.1} parent=1 // pred_region
      %s13 = ssub.s32 144, 144
      %14 = vsyncadd [#allocation3], %s13
      %s15 = sshll.u32 [#allocation2], 4
      %s16 = int_to_ptr.vmem [resolvable:$true] %s15
      %21 = dma.hbm_to_vmem [thread:$0]  %s0, 144, %s16, [#allocation3], 16, 16, 1
    $region5: #{tpu_custom_call.1} parent=1 // pred_fallthru
      _
    // Predicated region
    $region6: #{tpu_custom_call.1} parent=1 // pred_check
      _
    $region7: #{tpu_custom_call.1} parent=1 // pred_check_branch
      %23 = sbr.rel (0) target = $region9
    $region8: #{tpu_custom_call.1} parent=1 // pred_region
      %s25 = ssub.s32 144, 144
      %26 = vsyncadd [#allocation6], %s25
      %s27 = sshll.u32 [#allocation5], 4
      %s28 = int_to_ptr.vmem [resolvable:$true] %s27
      %33 = dma.hbm_to_vmem [thread:$0]  %s1, 144, %s28, [#allocation6], 16, 16, 1
    $region9: #{tpu_custom_call.1} parent=1 // pred_fallthru
      _
    // Predicated region
    $region10: #{tpu_custom_call.1} parent=1 // pred_check
      _
    $region11: #{tpu_custom_call.1} parent=1 // pred_check_branch
      %35 = sbr.rel (0) target = $region13
    $region12: #{tpu_custom_call.1} parent=1 // pred_region
      %36 = dma.done [#allocation3], 144
    $region13: #{tpu_custom_call.1} parent=1 // pred_fallthru
      _
    // Predicated region
    $region14: #{tpu_custom_call.1} parent=1 // pred_check
      _
    $region15: #{tpu_custom_call.1} parent=1 // pred_check_branch
      %38 = sbr.rel (0) target = $region17
    $region16: #{tpu_custom_call.1} parent=1 // pred_region
      %39 = dma.done [#allocation6], 144
    $region17: #{tpu_custom_call.1} parent=1 // pred_fallthru
      _
    %s40 = smul.u32 0, 128
    %s41 = sadd.s32 0, 1
    %s42 = scalar_lea.vmem [#allocation2], %s41
    %v43 = vld [vmem:[%s42] sm:$0x1]
    %v44 = vld [vmem:[#allocation2] sm:$0x1]
    %v45 = vsub.f32 %v43, %v44
    %s46 = sadd.s32 0, 4
    %s47 = scalar_lea.vmem [#allocation2], %s46
    %v48 = vld [vmem:[%s47] sm:$0x1]
    %s49 = sadd.s32 0, 3
    %s50 = scalar_lea.vmem [#allocation2], %s49
    %v51 = vld [vmem:[%s50] sm:$0x1]
    %v52 = vsub.f32 %v48, %v51
    %s53 = sadd.s32 0, 7
    %s54 = scalar_lea.vmem [#allocation2], %s53
    %v55 = vld [vmem:[%s54] sm:$0x1]
    %s56 = sadd.s32 0, 6
    %s57 = scalar_lea.vmem [#allocation2], %s56
    %v58 = vld [vmem:[%s57] sm:$0x1]
    %v59 = vsub.f32 %v55, %v58
    %s60 = sadd.s32 0, 2
    %s61 = scalar_lea.vmem [#allocation2], %s60
    %v62 = vld [vmem:[%s61] sm:$0x1]
    %v63 = vsub.f32 %v62, %v43
    %s64 = sadd.s32 0, 5
    %s65 = scalar_lea.vmem [#allocation2], %s64
    %v66 = vld [vmem:[%s65] sm:$0x1]
    %v67 = vsub.f32 %v66, %v48
    %s68 = sadd.s32 0, 8
    %s69 = scalar_lea.vmem [#allocation2], %s68
    %v70 = vld [vmem:[%s69] sm:$0x1]
    %v71 = vsub.f32 %v70, %v55
    %v72 = vmul.f32 %v52, %v71
    %v73 = vmul.f32 %v59, %v67
    %v74 = vsub.f32 %v72, %v73
    %v75 = vmul.f32 %v59, %v63
    %v76 = vmul.f32 %v45, %v71
    %v77 = vsub.f32 %v75, %v76
    %v78 = vmul.f32 %v45, %v67
    %v79 = vmul.f32 %v52, %v63
    %v80 = vsub.f32 %v78, %v79
    %s81 = scalar_lea.vmem [#allocation5], %s41
    %v82 = vld [vmem:[%s81] sm:$0x1]
    %v83 = vld [vmem:[#allocation5] sm:$0x1]
    %v84 = vsub.f32 %v82, %v83
    %s85 = scalar_lea.vmem [#allocation5], %s46
    %v86 = vld [vmem:[%s85] sm:$0x1]
    %s87 = scalar_lea.vmem [#allocation5], %s49
    %v88 = vld [vmem:[%s87] sm:$0x1]
    %v89 = vsub.f32 %v86, %v88
    %s90 = scalar_lea.vmem [#allocation5], %s53
    %v91 = vld [vmem:[%s90] sm:$0x1]
    %s92 = scalar_lea.vmem [#allocation5], %s56
    %v93 = vld [vmem:[%s92] sm:$0x1]
    %v94 = vsub.f32 %v91, %v93
    %s95 = scalar_lea.vmem [#allocation5], %s60
    %v96 = vld [vmem:[%s95] sm:$0x1]
    %v97 = vsub.f32 %v96, %v82
    %s98 = scalar_lea.vmem [#allocation5], %s64
    %v99 = vld [vmem:[%s98] sm:$0x1]
    %v100 = vsub.f32 %v99, %v86
    %s101 = scalar_lea.vmem [#allocation5], %s68
    %v102 = vld [vmem:[%s101] sm:$0x1]
    %v103 = vsub.f32 %v102, %v91
    %v104 = vmul.f32 %v89, %v103
    %v105 = vmul.f32 %v94, %v100
    %v106 = vsub.f32 %v104, %v105
    %v107 = vmul.f32 %v94, %v97
    %v108 = vmul.f32 %v84, %v103
    %v109 = vsub.f32 %v107, %v108
    %v110 = vmul.f32 %v84, %v100
    %v111 = vmul.f32 %v89, %v97
    %v112 = vsub.f32 %v110, %v111
    %v113 = vmul.f32 %v74, %v106
    %v114 = vmul.f32 %v77, %v109
    %v115 = vadd.f32 %v113, %v114
    %v116 = vmul.f32 %v80, %v112
    %v117 = vadd.f32 %v115, %v116
    %v118 = vmul.f32 %v74, %v74
    %v119 = vmul.f32 %v77, %v77
    %v120 = vadd.f32 %v118, %v119
    %v121 = vmul.f32 %v80, %v80
    %v122 = vadd.f32 %v120, %v121
    %v123 = vmul.f32 %v106, %v106
    %v124 = vmul.f32 %v109, %v109
    %v125 = vadd.f32 %v123, %v124
    %v126 = vmul.f32 %v112, %v112
    %v127 = vadd.f32 %v125, %v126
    %v128 = vmul.f32 %v122, %v127
    %v129 = vmax.f32 %v128, 1e-16
    %v130 = vrsqrt.pop %v129
    %v131 = vmul.f32 %v117, %v130
    %v132 = vsub.f32 1.0, %v131
    %v133 = vlaneseq
    %v134 = vshrl.u32 %v133, 7
    %v135 = vlaneseq
    %v136 = vand.u32 %v135, 127
    %v137 = vstv 0
    %v138 = vadd.s32 %v137, %v134
    %v139 = vmul.u32 %v138, 128
    %v140 = vstv %s40
    %v141 = vadd.s32 %v140, %v139
    %v142 = vadd.s32 %v141, %v136
    %vm143 = vcmp.lt.s32.totalorder %v142, 48
    %v144 = vsel %vm143, %v132, 0.0
    %v145 = vadd.f32 %v144, 0.0
    %v146 = vadd.f32 %v145, 0.0
    %147 = vst [vmem:[#allocation7] sm:$0x1] %v146
    // Predicated region
    $region18: #{tpu_custom_call.1} parent=1 // pred_check
      _
    $region19: #{tpu_custom_call.1} parent=1 // pred_check_branch
      %149 = sbr.rel (0) target = $region21
    $region20: #{tpu_custom_call.1} parent=1 // pred_region
      %s151 = ssub.s32 16, 16
      %152 = vsyncadd [#allocation4], %s151
      %s154 = sshll.u32 [#allocation7], 4
      %s155 = int_to_ptr.vmem [resolvable:$true] %s154
      %157 = dma.vmem_to_hbm [thread:$0]  %s155, 16, %s2, [#allocation4]
    $region21: #{tpu_custom_call.1} parent=1 // pred_fallthru
      _
    // Predicated region
    $region22: #{tpu_custom_call.1} parent=1 // pred_check
      _
    $region23: #{tpu_custom_call.1} parent=1 // pred_check_branch
      %159 = sbr.rel (0) target = $region25
    $region24: #{tpu_custom_call.1} parent=1 // pred_region
      %160 = dma.done [#allocation4], 16
    $region25: #{tpu_custom_call.1} parent=1 // pred_fallthru
      _
    %161 = vsyncpa [#allocation3], 1
    %162 = vsyncpa [#allocation6], 1
    %163 = vsyncpa [#allocation4], 1

</llo_original>
